<compile_context>
chip_gen: v6e
topology: v6e:2x2x1
jax: 0.10.0
libtpu: 0.0.40
codegen_flags: <defaults>
</compile_context>

<pallas_src>
import jax
import jax.numpy as jnp
from jax import lax
from jax.experimental import pallas as pl
from jax.experimental.pallas import tpu as pltpu


def _bayesian_linear_kernel(x_ref, wp_ref, bp_ref, we_ref, be_ref, o_ref):
    """One grid step == one block of Monte-Carlo samples.

    x_ref  : (batch, in)            f32
    wp_ref : (2, out, in)           bf16   [0]=mu, [1]=sigma (exp'd in wrapper)
    bp_ref : (2, 1, out)            f32    [0]=mu, [1]=sigma
    we_ref : (s_blk, out, in)       bf16   eps for this sample block
    be_ref : (s_blk, 1, out)        f32
    o_ref  : (batch, s_blk*out)     x.dtype (sample axis folded into lanes)
    """
    s_blk, out_f, in_f = we_ref.shape

    # Reparameterization trick in f32 (bf16 -> f32 upcast is exact; v5e-safe).
    w = (wp_ref[0].astype(jnp.float32)
         + wp_ref[1].astype(jnp.float32) * we_ref[...].astype(jnp.float32))
    w = w.reshape(s_blk * out_f, in_f)                     # (s_blk*out, in)

    # F.linear for the whole sample block with ONE MXU call: contract dim 1 of
    # x with dim 1 of w (no transpose), bf16 operands, f32 accumulation.
    y = lax.dot_general(
        x_ref[...].astype(jnp.bfloat16),
        w.astype(jnp.bfloat16),
        dimension_numbers=(((1,), (1,)), ((), ())),
        preferred_element_type=jnp.float32)                # (batch, s_blk*out)

    b = bp_ref[0] + bp_ref[1] * be_ref[...]                # (s_blk, 1, out) f32
    o_ref[...] = (y + b.reshape(1, s_blk * out_f)).astype(o_ref.dtype)


def _draw_eps(key, num_samples, out_features, in_features):
    """Deterministic eps draw shared by the wrapper and the reference check."""
    k_w, k_b = jax.random.split(key)
    eps_w = jax.random.normal(
        k_w, (num_samples, out_features, in_features), jnp.float32)
    eps_b = jax.random.normal(
        k_b, (num_samples, 1, out_features), jnp.float32)
    return eps_w, eps_b


def bayesian_linear(x, weight_mu, weight_logsigma, bias_mu, bias_logsigma, key,
                    *, num_samples: int = 1, samples_per_block: int | None = None,
                    param_dtype=jnp.bfloat16):
    """Pallas forward of BayesianLinear.

    Returns y of shape (batch, out) when num_samples == 1, else
    (num_samples, batch, out).
    """
    batch, in_features = x.shape
    out_features = weight_mu.shape[0]
    if samples_per_block is None:
        samples_per_block = num_samples
    assert num_samples % samples_per_block == 0
    s_blk = samples_per_block
    num_blocks = num_samples // s_blk
    n_lanes = s_blk * out_features

    # Ship sigma = exp(logsigma) (one-time wrapper fusion), stacked with mu and
    # stored bf16: 3 DMA streams, half the weight-param bytes, no in-kernel exp.
    wparams = jnp.stack(
        [weight_mu, jnp.exp(weight_logsigma)]).astype(param_dtype)     # (2,out,in)
    bparams = jnp.stack(
        [bias_mu, jnp.exp(bias_logsigma)]).reshape(
            2, 1, out_features).astype(jnp.float32)                    # (2,1,out)

    eps_w, eps_b = _draw_eps(key, num_samples, out_features, in_features)
    eps_w = eps_w.astype(param_dtype)                                  # bf16 stream

    cost = pl.CostEstimate(
        flops=2 * num_samples * batch * out_features * in_features,
        transcendentals=0,
        bytes_accessed=int(
            x.size * x.dtype.itemsize
            + num_blocks * wparams.size * wparams.dtype.itemsize
            + num_blocks * bparams.size * bparams.dtype.itemsize
            + eps_w.size * eps_w.dtype.itemsize
            + eps_b.size * eps_b.dtype.itemsize
            + batch * num_samples * out_features * x.dtype.itemsize))

    # TODO(synk): for tiny S_blk*out (<128 lanes) pad out_features to a
    # multiple of 128 for a fully unmasked output store.
    y_flat = pl.pallas_call(
        _bayesian_linear_kernel,
        out_shape=jax.ShapeDtypeStruct(
            (batch, num_samples * out_features), x.dtype),
        grid=(num_blocks,),
        in_specs=[
            pl.BlockSpec((batch, in_features), lambda j: (0, 0)),
            pl.BlockSpec((2, out_features, in_features), lambda j: (0, 0, 0)),
            pl.BlockSpec((2, 1, out_features), lambda j: (0, 0, 0)),
            pl.BlockSpec((s_blk, out_features, in_features), lambda j: (j, 0, 0)),
            pl.BlockSpec((s_blk, 1, out_features), lambda j: (j, 0, 0)),
        ],
        out_specs=pl.BlockSpec((batch, n_lanes), lambda j: (0, j)),
        compiler_params=pltpu.CompilerParams(
            dimension_semantics=("arbitrary",)),
        cost_estimate=cost,
    )(x, wparams, bparams, eps_w, eps_b)

    # (batch, S*out) -> (S, batch, out); wrapper-side layout glue only.
    y = y_flat.reshape(batch, num_samples, out_features).transpose(1, 0, 2)
    if num_samples == 1:
        return y[0]
    return y


if __name__ == "__main__":
    batch, in_features, out_features = 8, 32, 16

    root = jax.random.PRNGKey(0)
    k_x, k_wmu, k_bmu, k_eps1, k_eps2 = jax.random.split(root, 5)

    # Deterministic parameter init mirroring the PyTorch __init__:
    #   weight_mu ~ N(0, 0.1), weight_logsigma = -2.5 (bias likewise).
    x = jax.random.normal(k_x, (batch, in_features), dtype=jnp.float32)
    weight_mu = 0.1 * jax.random.normal(
        k_wmu, (out_features, in_features), dtype=jnp.float32)
    weight_logsigma = jnp.full((out_features, in_features), -2.5, jnp.float32)
    bias_mu = 0.1 * jax.random.normal(k_bmu, (out_features,), dtype=jnp.float32)
    bias_logsigma = jnp.full((out_features,), -2.5, jnp.float32)

    bf = jnp.bfloat16
    def q(a):  # replicate the kernel's bf16 rounding exactly
        return a.astype(bf).astype(jnp.float32)

    # --- single sample (matches the module's forward) -----------------------
    y = bayesian_linear(x, weight_mu, weight_logsigma, bias_mu, bias_logsigma,
                        k_eps1, num_samples=1)
    jax.block_until_ready(y)
    assert y.shape == (batch, out_features)

    eps_w1, eps_b1 = _draw_eps(k_eps1, 1, out_features, in_features)
    w_s = q(weight_mu) + q(jnp.exp(weight_logsigma)) * q(eps_w1[0])
    b_s = bias_mu + jnp.exp(bias_logsigma) * eps_b1[0]                 # (1, out)
    y_ref = jnp.dot(q(x), q(w_s).T,
                    precision=jax.lax.Precision.HIGHEST) + b_s
    err = float(jnp.max(jnp.abs(y - y_ref)))
    assert jnp.allclose(y, y_ref, atol=2e-3, rtol=2e-3), err

    # Sampled weights should be a standard-normal perturbation of mu.
    eps_chk = (w_s - q(weight_mu)) / q(jnp.exp(weight_logsigma))
    assert bool(jnp.all(jnp.isfinite(eps_chk)))
    assert abs(float(eps_chk.mean())) < 0.3
    assert 0.6 < float(eps_chk.std()) < 1.4

    # --- amortized Monte-Carlo path: 16 samples, 8 per grid step ------------
    # (each step's output block is a lane-dense 8x128 tile -> unmasked stores)
    num_samples = 16
    y_mc = bayesian_linear(x, weight_mu, weight_logsigma, bias_mu,
                           bias_logsigma, k_eps2,
                           num_samples=num_samples, samples_per_block=8)
    jax.block_until_ready(y_mc)
    assert y_mc.shape == (num_samples, batch, out_features)
    assert bool(jnp.all(jnp.isfinite(y_mc)))
    assert float(jnp.std(y_mc, axis=0).mean()) > 1e-3   # samples are distinct

    # Check one sample from the second grid block against the reference.
    eps_w2, eps_b2 = _draw_eps(k_eps2, num_samples, out_features, in_features)
    s = 11
    w_s2 = q(weight_mu) + q(jnp.exp(weight_logsigma)) * q(eps_w2[s])
    b_s2 = bias_mu + jnp.exp(bias_logsigma) * eps_b2[s]
    y_ref2 = jnp.dot(q(x), q(w_s2).T,
                     precision=jax.lax.Precision.HIGHEST) + b_s2
    err2 = float(jnp.max(jnp.abs(y_mc[s] - y_ref2)))
    assert jnp.allclose(y_mc[s], y_ref2, atol=2e-3, rtol=2e-3), err2

    # TODO(synk): kl_divergence() is an analytic reduction over the params
    # (not part of forward()); it stays in plain JAX if needed.
    print("KERNEL_OK")
</pallas_src>

<mosaic_0001>
module attributes {stable_mosaic.version = 11 : i64} {
  func.func @_bayesian_linear_kernel(%arg0: i32, %arg1: memref<8x32xf32, #tpu.memory_space<vmem>>, %arg2: memref<2x16x32xbf16, #tpu.memory_space<vmem>>, %arg3: memref<2x1x16xf32, #tpu.memory_space<vmem>>, %arg4: memref<1x16x32xbf16, #tpu.memory_space<vmem>>, %arg5: memref<1x1x16xf32, #tpu.memory_space<vmem>>, %arg6: memref<8x16xf32, #tpu.memory_space<vmem>>) attributes {dimension_semantics = [#tpu.dimension_semantics<arbitrary>], iteration_bounds = array<i64: 1>, scalar_prefetch = 0 : i64, scratch_operands = 0 : i64, tpu.core_type = #tpu.core_type<tc>, window_params = [{pipeline_mode = #tpu.pipeline_mode<synchronous>, transform_indices = @transform_0, window_bounds = array<i64: 8, 32>}, {pipeline_mode = #tpu.pipeline_mode<synchronous>, transform_indices = @transform_1, window_bounds = array<i64: 2, 16, 32>}, {pipeline_mode = #tpu.pipeline_mode<synchronous>, transform_indices = @transform_2, window_bounds = array<i64: 2, 1, 16>}, {transform_indices = @transform_3, window_bounds = array<i64: 1, 16, 32>}, {transform_indices = @transform_4, window_bounds = array<i64: 1, 1, 16>}, {transform_indices = @transform_5, window_bounds = array<i64: 8, 16>}]} {
    %c0 = arith.constant 0 : index
    %c0_0 = arith.constant 0 : index
    %c0_1 = arith.constant 0 : index
    %0 = vector.load %arg2[%c0, %c0_0, %c0_1] : memref<2x16x32xbf16, #tpu.memory_space<vmem>>, vector<1x16x32xbf16>
    %1 = vector.shape_cast %0 : vector<1x16x32xbf16> to vector<16x32xbf16>
    %2 = arith.extf %1 : vector<16x32xbf16> to vector<16x32xf32>
    %c1 = arith.constant 1 : index
    %c0_2 = arith.constant 0 : index
    %c0_3 = arith.constant 0 : index
    %3 = vector.load %arg2[%c1, %c0_2, %c0_3] : memref<2x16x32xbf16, #tpu.memory_space<vmem>>, vector<1x16x32xbf16>
    %4 = vector.shape_cast %3 : vector<1x16x32xbf16> to vector<16x32xbf16>
    %5 = arith.extf %4 : vector<16x32xbf16> to vector<16x32xf32>
    %c0_4 = arith.constant 0 : index
    %c0_5 = arith.constant 0 : index
    %c0_6 = arith.constant 0 : index
    %6 = vector.load %arg4[%c0_4, %c0_5, %c0_6] : memref<1x16x32xbf16, #tpu.memory_space<vmem>>, vector<1x16x32xbf16>
    %7 = arith.extf %6 : vector<1x16x32xbf16> to vector<1x16x32xf32>
    %8 = vector.shape_cast %5 : vector<16x32xf32> to vector<1x16x32xf32>
    %9 = arith.mulf %8, %7 : vector<1x16x32xf32>
    %10 = vector.shape_cast %2 : vector<16x32xf32> to vector<1x16x32xf32>
    %11 = arith.addf %10, %9 : vector<1x16x32xf32>
    %12 = vector.shape_cast %11 : vector<1x16x32xf32> to vector<16x32xf32>
    %c0_7 = arith.constant 0 : index
    %c0_8 = arith.constant 0 : index
    %13 = vector.load %arg1[%c0_7, %c0_8] : memref<8x32xf32, #tpu.memory_space<vmem>>, vector<8x32xf32>
    %14 = arith.truncf %13 : vector<8x32xf32> to vector<8x32xbf16>
    %15 = arith.truncf %12 : vector<16x32xf32> to vector<16x32xbf16>
    %cst = arith.constant dense<0.000000e+00> : vector<8x16xf32>
    %16 = tpu.matmul %14, %15, %cst {dimension_numbers = #tpu.dot_dimension_numbers<[1], [1], [0], [0], [0, 0, 1, 0], [], []>} : vector<8x32xbf16>, vector<16x32xbf16>, vector<8x16xf32> -> vector<8x16xf32>
    %c0_9 = arith.constant 0 : index
    %c0_10 = arith.constant 0 : index
    %c0_11 = arith.constant 0 : index
    %17 = vector.load %arg3[%c0_9, %c0_10, %c0_11] : memref<2x1x16xf32, #tpu.memory_space<vmem>>, vector<1x1x16xf32>
    %18 = vector.shape_cast %17 : vector<1x1x16xf32> to vector<1x16xf32>
    %c1_12 = arith.constant 1 : index
    %c0_13 = arith.constant 0 : index
    %c0_14 = arith.constant 0 : index
    %19 = vector.load %arg3[%c1_12, %c0_13, %c0_14] : memref<2x1x16xf32, #tpu.memory_space<vmem>>, vector<1x1x16xf32>
    %20 = vector.shape_cast %19 : vector<1x1x16xf32> to vector<1x16xf32>
    %c0_15 = arith.constant 0 : index
    %c0_16 = arith.constant 0 : index
    %c0_17 = arith.constant 0 : index
    %21 = vector.load %arg5[%c0_15, %c0_16, %c0_17] : memref<1x1x16xf32, #tpu.memory_space<vmem>>, vector<1x1x16xf32>
    %22 = vector.shape_cast %20 : vector<1x16xf32> to vector<1x1x16xf32>
    %23 = arith.mulf %22, %21 : vector<1x1x16xf32>
    %24 = vector.shape_cast %18 : vector<1x16xf32> to vector<1x1x16xf32>
    %25 = arith.addf %24, %23 : vector<1x1x16xf32>
    %26 = vector.shape_cast %25 : vector<1x1x16xf32> to vector<1x16xf32>
    %27 = vector.broadcast %26 : vector<1x16xf32> to vector<8x16xf32>
    %28 = arith.addf %16, %27 : vector<8x16xf32>
    %c0_18 = arith.constant 0 : index
    %c0_19 = arith.constant 0 : index
    %29 = vector.load %arg6[%c0_18, %c0_19] : memref<8x16xf32, #tpu.memory_space<vmem>>, vector<8x16xf32>
    tpu.vector_store %arg6[%c0_18, %c0_19], %28 {strides = array<i32>} : memref<8x16xf32, #tpu.memory_space<vmem>>, vector<8x16xf32>,
    return
  }
  func.func @transform_0(%arg0: i32) -> (i32, i32) {
    %c0_i32 = arith.constant 0 : i32
    %c0_i32_0 = arith.constant 0 : i32
    %c0_i32_1 = arith.constant 0 : i32
    return %c0_i32, %c0_i32_0 : i32, i32
  }
  func.func @transform_1(%arg0: i32) -> (i32, i32, i32) {
    %c0_i32 = arith.constant 0 : i32
    %c0_i32_0 = arith.constant 0 : i32
    %c0_i32_1 = arith.constant 0 : i32
    %c0_i32_2 = arith.constant 0 : i32
    return %c0_i32, %c0_i32_0, %c0_i32_1 : i32, i32, i32
  }
  func.func @transform_2(%arg0: i32) -> (i32, i32, i32) {
    %c0_i32 = arith.constant 0 : i32
    %c0_i32_0 = arith.constant 0 : i32
    %c0_i32_1 = arith.constant 0 : i32
    %c0_i32_2 = arith.constant 0 : i32
    return %c0_i32, %c0_i32_0, %c0_i32_1 : i32, i32, i32
  }
  func.func @transform_3(%arg0: i32) -> (i32, i32, i32) {
    %c0_i32 = arith.constant 0 : i32
    %c0_i32_0 = arith.constant 0 : i32
    %c0_i32_1 = arith.constant 0 : i32
    return %arg0, %c0_i32, %c0_i32_0 : i32, i32, i32
  }
  func.func @transform_4(%arg0: i32) -> (i32, i32, i32) {
    %c0_i32 = arith.constant 0 : i32
    %c0_i32_0 = arith.constant 0 : i32
    %c0_i32_1 = arith.constant 0 : i32
    return %arg0, %c0_i32, %c0_i32_0 : i32, i32, i32
  }
  func.func @transform_5(%arg0: i32) -> (i32, i32) {
    %c0_i32 = arith.constant 0 : i32
    %c0_i32_0 = arith.constant 0 : i32
    return %c0_i32, %arg0 : i32, i32
  }
}

</mosaic_0001>

<llo_original>
// kernel: tpu_custom_call.1
$region0: #{tpu_custom_call.1}
  #allocation0 [shape = 'u32[]', space=smem, size = 0x4, offset = 0x4, fixed_abs, tag = 'smem constant byte address 0x4 - core index']
  #allocation1 [shape = 'u32[144,128]{1,0:T(1,128)}', space=vmem, size = 0x12000, scoped, tag = 'internal scratch']
  %s0 = inlined_call_operand.hbm [shape: f32[8,32], index: 0, kind: input, shape index: {}]
  %s1 = inlined_call_operand.hbm [shape: bf16[2,16,32], index: 1, kind: input, shape index: {}]
  %s2 = inlined_call_operand.vmem [shape: f32[2,1,16], index: 2, kind: input, shape index: {}]
  %s3 = inlined_call_operand.hbm [shape: bf16[1,16,32], index: 3, kind: input, shape index: {}]
  %s4 = inlined_call_operand.vmem [shape: f32[1,1,16], index: 4, kind: input, shape index: {}]
  %s5 = inlined_call_operand.hbm [shape: f32[8,16], index: 5, kind: output, shape index: {}]
  %s6 = sld [smem:[#allocation0]]
  $region42: #{tpu_custom_call.1} parent=0
    _
  %s8 = ssub.s32 1, %s6
  %s9 = scalar_select 0, %s8, %s6
  $region1: #{tpu_custom_call.1} parent=0
    #allocation2 [shape = 'u8[4096]{0}', space=vmem, size = 0x1000, scoped, tag = 'input window, operand 0, single buffered']
    #allocation3 [shape = 's32[1]{0}', space=sflag, size = 0x4, scoped, tag = 'scoped memory for tpu_custom_call.1']
    #allocation4 [shape = 's32[1]{0}', space=sflag, size = 0x4, scoped, tag = 'scoped memory for tpu_custom_call.1']
    #allocation5 [shape = 'u8[8192]{0}', space=vmem, size = 0x2000, scoped, tag = 'input window, operand 1, single buffered']
    #allocation6 [shape = 's32[1]{0}', space=sflag, size = 0x4, scoped, tag = 'scoped memory for tpu_custom_call.1']
    #allocation7 [shape = 'u8[4096]{0}', space=vmem, size = 0x1000, scoped, tag = 'input window, operand 3, single buffered']
    #allocation8 [shape = 'u8[4096]{0}', space=vmem, size = 0x1000, scoped, tag = 'output window, operand 0, single buffered']
    %10 = vsyncpa [#allocation3], 0
    %11 = vsyncpa [#allocation6], 0
    %12 = vsyncpa [#allocation4], 0
    // Predicated region
    $region2: #{tpu_custom_call.1} parent=1 // pred_check
      _
    $region3: #{tpu_custom_call.1} parent=1 // pred_check_branch
      %14 = sbr.rel (0) target = $region5
    $region4: #{tpu_custom_call.1} parent=1 // pred_region
      %s16 = ssub.s32 128, 128
      %17 = vsyncadd [#allocation3], %s16
      %s19 = sshll.u32 [#allocation2], 4
      %s20 = int_to_ptr.vmem [resolvable:$true] %s19
      %22 = dma.hbm_to_vmem [thread:$0]  %s0, 128, %s20, [#allocation3]
    $region5: #{tpu_custom_call.1} parent=1 // pred_fallthru
      _
    // Predicated region
    $region6: #{tpu_custom_call.1} parent=1 // pred_check
      _
    $region7: #{tpu_custom_call.1} parent=1 // pred_check_branch
      %24 = sbr.rel (0) target = $region9
    $region8: #{tpu_custom_call.1} parent=1 // pred_region
      %s26 = ssub.s32 256, 256
      %27 = vsyncadd [#allocation6], %s26
      %s28 = sshll.u32 [#allocation5], 4
      %s29 = int_to_ptr.vmem [resolvable:$true] %s28
      %34 = dma.hbm_to_vmem [thread:$0]  %s1, 256, %s29, [#allocation6], 64, 64, 4
    $region9: #{tpu_custom_call.1} parent=1 // pred_fallthru
      _
    // Predicated region
    $region10: #{tpu_custom_call.1} parent=1 // pred_check
      _
    $region11: #{tpu_custom_call.1} parent=1 // pred_check_branch
      %36 = sbr.rel (0) target = $region13
    $region12: #{tpu_custom_call.1} parent=1 // pred_region
      _
    $region13: #{tpu_custom_call.1} parent=1 // pred_fallthru
      _
    // Predicated region
    $region14: #{tpu_custom_call.1} parent=1 // pred_check
      _
    $region15: #{tpu_custom_call.1} parent=1 // pred_check_branch
      %38 = sbr.rel (0) target = $region17
    $region16: #{tpu_custom_call.1} parent=1 // pred_region
      %s40 = ssub.s32 128, 128
      %41 = vsyncadd [#allocation6], %s40
      %s42 = sshll.u32 [#allocation7], 4
      %s43 = int_to_ptr.vmem [resolvable:$true] %s42
      %48 = dma.hbm_to_vmem [thread:$0]  %s3, 128, %s43, [#allocation6], 64, 64, 4
    $region17: #{tpu_custom_call.1} parent=1 // pred_fallthru
      _
    // Predicated region
    $region18: #{tpu_custom_call.1} parent=1 // pred_check
      _
    $region19: #{tpu_custom_call.1} parent=1 // pred_check_branch
      %50 = sbr.rel (0) target = $region21
    $region20: #{tpu_custom_call.1} parent=1 // pred_region
      _
    $region21: #{tpu_custom_call.1} parent=1 // pred_fallthru
      _
    // Predicated region
    $region22: #{tpu_custom_call.1} parent=1 // pred_check
      _
    $region23: #{tpu_custom_call.1} parent=1 // pred_check_branch
      %52 = sbr.rel (0) target = $region25
    $region24: #{tpu_custom_call.1} parent=1 // pred_region
      %53 = dma.done [#allocation3], 128
    $region25: #{tpu_custom_call.1} parent=1 // pred_fallthru
      _
    // Predicated region
    $region26: #{tpu_custom_call.1} parent=1 // pred_check
      _
    $region27: #{tpu_custom_call.1} parent=1 // pred_check_branch
      %55 = sbr.rel (0) target = $region29
    $region28: #{tpu_custom_call.1} parent=1 // pred_region
      %56 = dma.done [#allocation6], 256
    $region29: #{tpu_custom_call.1} parent=1 // pred_fallthru
      _
    // Predicated region
    $region30: #{tpu_custom_call.1} parent=1 // pred_check
      _
    $region31: #{tpu_custom_call.1} parent=1 // pred_check_branch
      %58 = sbr.rel (0) target = $region33
    $region32: #{tpu_custom_call.1} parent=1 // pred_region
      %59 = dma.done [#allocation6], 128
    $region33: #{tpu_custom_call.1} parent=1 // pred_fallthru
      _
    %v61 = vld [vmem:[#allocation5] sm:$0xf]
    %v62 = vld [vmem:[#allocation5 + $0x4] sm:$0xf]
    %v63 = vunpack.c.l.bf16 %v61
    %v64 = vunpack.c.l.bf16 %v62
    %s65 = scalar_lea.vmem [#allocation5], 8
    %v66 = vld [vmem:[%s65] sm:$0xf]
    %v67 = vld [vmem:[%s65 + $0x4] sm:$0xf]
    %v68 = vunpack.c.l.bf16 %v66
    %v69 = vunpack.c.l.bf16 %v67
    %v70 = vld [vmem:[#allocation7] sm:$0xf]
    %v71 = vld [vmem:[#allocation7 + $0x4] sm:$0xf]
    %v72 = vunpack.c.l.bf16 %v70
    %v73 = vunpack.c.l.bf16 %v71
    %v74 = vmul.f32 %v68, %v72
    %v75 = vmul.f32 %v69, %v73
    %v76 = vadd.f32 %v63, %v74
    %v77 = vadd.f32 %v64, %v75
    %v78 = vld [vmem:[#allocation2] sm:$0xff]
    %v79 = vpack.c.bf16 %v78, %v78
    %v80 = vpack.c.bf16 %v77, %v76
    %v81 = vld [vmem:[%s2] sm:$0x1]
    %s82 = scalar_lea.vmem %s2, 1
    %v83 = vld [vmem:[%s82] sm:$0x1]
    %v84 = vld [vmem:[%s4] sm:$0x1]
    %v85 = vmul.f32 %v83, %v84
    %v86 = vadd.f32 %v81, %v85
    %v88 = vlaneseq
    %v89 = vshrl.u32 %v88, 7
    %v90 = vsub.s32 0, %v89
    %v91 = vrot.slane %v86, %v90
    %vm93 = vcmask 261120
    %v95 = vsel %vm93, %v79, 0
    %v98 = vsel %vm93, %v80, 0
    %100 = vmatprep.subr.bf16.mxu0 0
    %101 = vmatpush1.bf16.xpose.msra.mxu0 0
    %102 = vmatprep.subr.bf16.mxu0 0
    %103 = vmatpush1.bf16.xpose.msra.mxu0 0
    %104 = vmatprep.subr.bf16.mxu0 0
    %105 = vmatpush1.bf16.xpose.msra.mxu0 0
    %106 = vmatprep.subr.bf16.mxu0 0
    %107 = vmatpush1.bf16.xpose.msra.mxu0 0
    %108 = vmatprep.subr.bf16.mxu0 0
    %109 = vmatpush1.bf16.xpose.msra.mxu0 0
    %110 = vmatprep.subr.bf16.mxu0 0
    %111 = vmatpush1.bf16.xpose.msra.mxu0 0
    %112 = vmatprep.subr.bf16.mxu0 0
    %113 = vmatpush1.bf16.xpose.msra.mxu0 0
    %114 = vmatprep.subr.bf16.mxu0 0
    %115 = vmatpush1.bf16.xpose.msra.mxu0 %v98
    %116 = vmatprep.subr.bf16.mxu0 0
    %117 = vmatpush2.bf16.xpose.msra.mxu0 0
    %118 = vmatprep.subr.bf16.mxu0 0
    %119 = vmatpush2.bf16.xpose.msra.mxu0 0
    %120 = vmatprep.subr.bf16.mxu0 0
    %121 = vmatpush2.bf16.xpose.msra.mxu0 0
    %122 = vmatprep.subr.bf16.mxu0 0
    %123 = vmatpush2.bf16.xpose.msra.mxu0 0
    %124 = vmatprep.subr.bf16.mxu0 0
    %125 = vmatpush2.bf16.xpose.msra.mxu0 0
    %126 = vmatprep.subr.bf16.mxu0 0
    %127 = vmatpush2.bf16.xpose.msra.mxu0 0
    %128 = vmatprep.subr.bf16.mxu0 0
    %129 = vmatpush2.bf16.xpose.msra.mxu0 0
    %130 = vmatprep.subr.bf16.mxu0 0
    %131 = vmatpush2.bf16.xpose.msra.mxu0 0
    %132 = vmatprep.mubr.bf16.mxu0 0
    %133 = vmatmul.mubr.bf16.gmra.mxu0 %v95
    %v134 = vpop.f32.mrf.mxu0
    %v135 = vadd.f32 %v91, %v134
    %v136 = vpop.f32.mrf.mxu0
    %v137 = vpop.f32.mrf.mxu0
    %v138 = vpop.f32.mrf.mxu0
    %139 = vdwg.mxu0
    %vm140 = vcmask 130048
    %141 = vst.msk [vmem:[#allocation8] sm:$0xff] %vm140, %v135
    // Predicated region
    $region34: #{tpu_custom_call.1} parent=1 // pred_check
      _
    $region35: #{tpu_custom_call.1} parent=1 // pred_check_branch
      %143 = sbr.rel (0) target = $region37
    $region36: #{tpu_custom_call.1} parent=1 // pred_region
      %s145 = ssub.s32 128, 128
      %146 = vsyncadd [#allocation4], %s145
      %s148 = sshll.u32 [#allocation8], 4
      %s149 = int_to_ptr.vmem [resolvable:$true] %s148
      %151 = dma.vmem_to_hbm [thread:$0]  %s149, 128, %s5, [#allocation4]
    $region37: #{tpu_custom_call.1} parent=1 // pred_fallthru
      _
    // Predicated region
    $region38: #{tpu_custom_call.1} parent=1 // pred_check
      _
    $region39: #{tpu_custom_call.1} parent=1 // pred_check_branch
      %153 = sbr.rel (0) target = $region41
    $region40: #{tpu_custom_call.1} parent=1 // pred_region
      %154 = dma.done [#allocation4], 128
    $region41: #{tpu_custom_call.1} parent=1 // pred_fallthru
      _
    %155 = vsyncpa [#allocation3], 1
    %156 = vsyncpa [#allocation6], 1
    %157 = vsyncpa [#allocation4], 1

</llo_original>
